<compile_context>
chip_gen: v6e
topology: v6e:2x2x1
jax: 0.10.0
libtpu: 0.0.40
codegen_flags: <defaults>
</compile_context>

<pallas_src>
import jax
import jax.numpy as jnp
from jax import lax
from jax.experimental import pallas as pl
from jax.experimental.pallas import tpu as pltpu


def critic_kernel(x_ref, w1_ref, b1_ref, w2_ref, b2_ref, out_ref):
    # fc1: (TB, Dp) @ (Dp, H) on the MXU, f32 accumulation.
    h = jnp.dot(x_ref[...], w1_ref[...], preferred_element_type=jnp.float32)
    # bias + ReLU on the VPU (f32, single broadcast of the (1,H) bias row).
    h = jnp.maximum(h + b1_ref[...], 0.0)
    # fc2: contract H between the (1, H) weight row and h (TB, H) — same
    # "rhs-transposed" dimension numbers as q @ k^T — yielding a lane-dense
    # (1, TB) row instead of a (TB, 1) column.
    v = lax.dot_general(
        w2_ref[...], h,
        dimension_numbers=(((1,), (1,)), ((), ())),
        preferred_element_type=jnp.float32,
    )
    # b2 is a scalar read off the SMEM scalar path.
    out_ref[...] = (v + b2_ref[0])[None].astype(out_ref.dtype)


def _round_up(x, m):
    return (x + m - 1) // m * m


def critic_forward(x, w1, b1, w2, b2, *, tb_max=512):
    B, D = x.shape
    H = w1.shape[1]

    # Pad the feature dim to full 128-lane width (unmasked loads / MXU feed).
    Dp = _round_up(D, 128)
    if Dp != D:
        x = jnp.pad(x, ((0, 0), (0, Dp - D)))
        w1 = jnp.pad(w1, ((0, Dp - D), (0, 0)))

    # Batch tile: big enough to amortize the ~0.35us per-grid-step overhead,
    # capped so double-buffered x tiles + resident weights stay well inside the
    # scoped VMEM budget (32 MiB default; only 64 MiB physical per-TC on v7x).
    tb = min(tb_max, _round_up(B, 8))
    while tb > 8 and (2 * tb * Dp + Dp * H) * 4 > (24 << 20):
        tb //= 2
    B_pad = _round_up(B, tb)
    if B_pad != B:
        x = jnp.pad(x, ((0, B_pad - B), (0, 0)))
    num_tiles = B_pad // tb

    out = pl.pallas_call(
        critic_kernel,
        out_shape=jax.ShapeDtypeStruct((num_tiles, 1, tb), jnp.float32),
        grid_spec=pltpu.PrefetchScalarGridSpec(
            num_scalar_prefetch=0,
            grid=(num_tiles,),
            in_specs=[
                pl.BlockSpec((tb, Dp), lambda i: (i, 0)),    # x: streamed
                pl.BlockSpec((Dp, H), lambda i: (0, 0)),     # w1: resident
                pl.BlockSpec((1, H), lambda i: (0, 0)),      # b1: resident
                pl.BlockSpec((1, H), lambda i: (0, 0)),      # w2 row: resident
                pl.BlockSpec(memory_space=pltpu.MemorySpace.SMEM),  # b2 scalar
            ],
            out_specs=pl.BlockSpec((1, 1, tb), lambda i: (i, 0, 0)),
        ),
        compiler_params=pltpu.CompilerParams(
            dimension_semantics=("parallel",)),
    )(x, w1, b1.reshape(1, H), w2.reshape(1, H), b2.reshape(1))

    # (num_tiles, 1, TB) -> (B, 1): tile i, lane j holds batch row i*TB + j.
    return out.reshape(B_pad, 1)[:B]


def init_params(key, input_size, hidden=64):
    # Deterministic init mimicking PyTorch Linear default: U(-1/sqrt(fan_in), +).
    k1, k2, k3, k4 = jax.random.split(key, 4)
    bound1 = 1.0 / jnp.sqrt(input_size)
    bound2 = 1.0 / jnp.sqrt(hidden)
    w1 = jax.random.uniform(k1, (input_size, hidden), jnp.float32, -bound1, bound1)
    b1 = jax.random.uniform(k2, (hidden,), jnp.float32, -bound1, bound1)
    w2 = jax.random.uniform(k3, (hidden, 1), jnp.float32, -bound2, bound2)
    b2 = jax.random.uniform(k4, (1,), jnp.float32, -bound2, bound2)
    return w1, b1, w2, b2


if __name__ == "__main__":
    key = jax.random.PRNGKey(0)
    kx, kp = jax.random.split(key)

    batch, input_size = 8, 32
    x = jax.random.normal(kx, (batch, input_size), jnp.float32)
    w1, b1, w2, b2 = init_params(kp, input_size)

    out = critic_forward(x, w1, b1, w2, b2)
    out = jax.block_until_ready(out)

    # Reference check in plain JAX (same math as the PyTorch forward).
    ref = jnp.maximum(x @ w1 + b1, 0.0) @ w2 + b2
    assert out.shape == (batch, 1)
    assert jnp.allclose(out, ref, atol=1e-5, rtol=1e-5)

    print("KERNEL_OK")
</pallas_src>

<mosaic_0001>
module attributes {stable_mosaic.version = 11 : i64} {
  func.func @critic_kernel(%arg0: i32, %arg1: memref<8x128xf32, #tpu.memory_space<vmem>>, %arg2: memref<128x64xf32, #tpu.memory_space<vmem>>, %arg3: memref<1x64xf32, #tpu.memory_space<vmem>>, %arg4: memref<1x64xf32, #tpu.memory_space<vmem>>, %arg5: memref<1xf32, #tpu.memory_space<smem>>, %arg6: memref<1x1x8xf32, #tpu.memory_space<vmem>>) attributes {dimension_semantics = [#tpu.dimension_semantics<parallel>], iteration_bounds = array<i64: 1>, scalar_prefetch = 0 : i64, scratch_operands = 0 : i64, tpu.core_type = #tpu.core_type<tc>, window_params = [{transform_indices = @transform_0, window_bounds = array<i64: 8, 128>}, {pipeline_mode = #tpu.pipeline_mode<synchronous>, transform_indices = @transform_1, window_bounds = array<i64: 128, 64>}, {pipeline_mode = #tpu.pipeline_mode<synchronous>, transform_indices = @transform_2, window_bounds = array<i64: 1, 64>}, {pipeline_mode = #tpu.pipeline_mode<synchronous>, transform_indices = @transform_3, window_bounds = array<i64: 1, 64>}, {transform_indices = @transform_4, window_bounds = array<i64: 1>}, {transform_indices = @transform_5, window_bounds = array<i64: 1, 1, 8>}]} {
    %c0 = arith.constant 0 : index
    %c0_0 = arith.constant 0 : index
    %0 = vector.load %arg1[%c0, %c0_0] : memref<8x128xf32, #tpu.memory_space<vmem>>, vector<8x128xf32>
    %c0_1 = arith.constant 0 : index
    %c0_2 = arith.constant 0 : index
    %1 = vector.load %arg2[%c0_1, %c0_2] : memref<128x64xf32, #tpu.memory_space<vmem>>, vector<128x64xf32>
    %cst = arith.constant dense<0.000000e+00> : vector<8x64xf32>
    %2 = tpu.matmul %0, %1, %cst {dimension_numbers = #tpu.dot_dimension_numbers<[1], [0], [0], [1], [0, 0, 1, 1], [], []>} : vector<8x128xf32>, vector<128x64xf32>, vector<8x64xf32> -> vector<8x64xf32>
    %c0_3 = arith.constant 0 : index
    %c0_4 = arith.constant 0 : index
    %3 = vector.load %arg3[%c0_3, %c0_4] : memref<1x64xf32, #tpu.memory_space<vmem>>, vector<1x64xf32>
    %4 = vector.broadcast %3 : vector<1x64xf32> to vector<8x64xf32>
    %5 = arith.addf %2, %4 : vector<8x64xf32>
    %cst_5 = arith.constant 0.000000e+00 : f32
    %6 = vector.broadcast %cst_5 : f32 to vector<8x64xf32>
    %7 = arith.maximumf %5, %6 : vector<8x64xf32>
    %c0_6 = arith.constant 0 : index
    %c0_7 = arith.constant 0 : index
    %8 = vector.load %arg4[%c0_6, %c0_7] : memref<1x64xf32, #tpu.memory_space<vmem>>, vector<1x64xf32>
    %cst_8 = arith.constant dense<0.000000e+00> : vector<1x8xf32>
    %9 = tpu.matmul %8, %7, %cst_8 {dimension_numbers = #tpu.dot_dimension_numbers<[1], [1], [0], [0], [0, 0, 1, 0], [], []>} : vector<1x64xf32>, vector<8x64xf32>, vector<1x8xf32> -> vector<1x8xf32>
    %c0_9 = arith.constant 0 : index
    %10 = memref.load %arg5[%c0_9] : memref<1xf32, #tpu.memory_space<smem>>
    %11 = vector.broadcast %10 : f32 to vector<1x8xf32>
    %12 = arith.addf %9, %11 : vector<1x8xf32>
    %13 = vector.shape_cast %12 : vector<1x8xf32> to vector<1x1x8xf32>
    %c0_10 = arith.constant 0 : index
    %c0_11 = arith.constant 0 : index
    %c0_12 = arith.constant 0 : index
    %14 = vector.load %arg6[%c0_10, %c0_11, %c0_12] : memref<1x1x8xf32, #tpu.memory_space<vmem>>, vector<1x1x8xf32>
    tpu.vector_store %arg6[%c0_10, %c0_11, %c0_12], %13 {strides = array<i32>} : memref<1x1x8xf32, #tpu.memory_space<vmem>>, vector<1x1x8xf32>,
    return
  }
  func.func @transform_0(%arg0: i32) -> (i32, i32) {
    %c0_i32 = arith.constant 0 : i32
    %c0_i32_0 = arith.constant 0 : i32
    return %arg0, %c0_i32 : i32, i32
  }
  func.func @transform_1(%arg0: i32) -> (i32, i32) {
    %c0_i32 = arith.constant 0 : i32
    %c0_i32_0 = arith.constant 0 : i32
    %c0_i32_1 = arith.constant 0 : i32
    return %c0_i32, %c0_i32_0 : i32, i32
  }
  func.func @transform_2(%arg0: i32) -> (i32, i32) {
    %c0_i32 = arith.constant 0 : i32
    %c0_i32_0 = arith.constant 0 : i32
    %c0_i32_1 = arith.constant 0 : i32
    return %c0_i32, %c0_i32_0 : i32, i32
  }
  func.func @transform_3(%arg0: i32) -> (i32, i32) {
    %c0_i32 = arith.constant 0 : i32
    %c0_i32_0 = arith.constant 0 : i32
    %c0_i32_1 = arith.constant 0 : i32
    return %c0_i32, %c0_i32_0 : i32, i32
  }
  func.func @transform_4(%arg0: i32) -> i32 {
    %c0_i32 = arith.constant 0 : i32
    %c0_i32_0 = arith.constant 0 : i32
    return %c0_i32 : i32
  }
  func.func @transform_5(%arg0: i32) -> (i32, i32, i32) {
    %c0_i32 = arith.constant 0 : i32
    %c0_i32_0 = arith.constant 0 : i32
    %c0_i32_1 = arith.constant 0 : i32
    return %arg0, %c0_i32, %c0_i32_0 : i32, i32, i32
  }
}

</mosaic_0001>

<llo_original>
// kernel: tpu_custom_call.1
$region0: #{tpu_custom_call.1}
  #allocation0 [shape = 'u32[]', space=smem, size = 0x4, offset = 0x4, fixed_abs, tag = 'smem constant byte address 0x4 - core index']
  #allocation1 [shape = 'u32[144,128]{1,0:T(1,128)}', space=vmem, size = 0x12000, scoped, tag = 'internal scratch']
  #allocation2 [shape = 'f32[1]{0:T(128)S(6)}', space=smem, size = 0x200, scoped, tag = 'scoped memory for tpu_custom_call.1']
  %s0 = inlined_call_operand.vmem [shape: f32[8,128], index: 0, kind: input, shape index: {}]
  %s1 = inlined_call_operand.vmem [shape: f32[128,64], index: 1, kind: input, shape index: {}]
  %s2 = inlined_call_operand.vmem [shape: f32[1,64], index: 2, kind: input, shape index: {}]
  %s3 = inlined_call_operand.vmem [shape: f32[1,64], index: 3, kind: input, shape index: {}]
  %s4 = inlined_call_operand.<no memory space> [shape: f32[1], index: 4, kind: input, shape index: {}]
  %s5 = inlined_call_operand.hbm [shape: f32[1,1,8], index: 5, kind: output, shape index: {}]
  %s6 = sld [smem:[#allocation0]]
  $region30: #{tpu_custom_call.1} parent=0
    _
  %s8 = ssub.s32 1, %s6
  %s9 = scalar_select 0, %s8, %s6
  %10 = sst [smem:[#allocation2]] %s4
  $region1: #{tpu_custom_call.1} parent=0
    #allocation3 [shape = 'u8[512]{0}', space=vmem, size = 0x400, scoped, tag = 'output window, operand 0, single buffered']
    #allocation4 [shape = 's32[1]{0}', space=sflag, size = 0x4, scoped, tag = 'scoped memory for tpu_custom_call.1']
    %11 = vsyncpa [#allocation4], 0
    // Predicated region
    $region2: #{tpu_custom_call.1} parent=1 // pred_check
      _
    $region3: #{tpu_custom_call.1} parent=1 // pred_check_branch
      %13 = sbr.rel (0) target = $region5
    $region4: #{tpu_custom_call.1} parent=1 // pred_region
      _
    $region5: #{tpu_custom_call.1} parent=1 // pred_fallthru
      _
    // Predicated region
    $region6: #{tpu_custom_call.1} parent=1 // pred_check
      _
    $region7: #{tpu_custom_call.1} parent=1 // pred_check_branch
      %15 = sbr.rel (0) target = $region9
    $region8: #{tpu_custom_call.1} parent=1 // pred_region
      _
    $region9: #{tpu_custom_call.1} parent=1 // pred_fallthru
      _
    // Predicated region
    $region10: #{tpu_custom_call.1} parent=1 // pred_check
      _
    $region11: #{tpu_custom_call.1} parent=1 // pred_check_branch
      %17 = sbr.rel (0) target = $region13
    $region12: #{tpu_custom_call.1} parent=1 // pred_region
      _
    $region13: #{tpu_custom_call.1} parent=1 // pred_fallthru
      _
    // Predicated region
    $region14: #{tpu_custom_call.1} parent=1 // pred_check
      _
    $region15: #{tpu_custom_call.1} parent=1 // pred_check_branch
      %19 = sbr.rel (0) target = $region17
    $region16: #{tpu_custom_call.1} parent=1 // pred_region
      _
    $region17: #{tpu_custom_call.1} parent=1 // pred_fallthru
      _
    // Predicated region
    $region18: #{tpu_custom_call.1} parent=1 // pred_check
      _
    $region19: #{tpu_custom_call.1} parent=1 // pred_check_branch
      %21 = sbr.rel (0) target = $region21
    $region20: #{tpu_custom_call.1} parent=1 // pred_region
      _
    $region21: #{tpu_custom_call.1} parent=1 // pred_fallthru
      _
    %v22 = vld [vmem:[%s0] sm:$0xff]
    %v23 = vld [vmem:[%s1] sm:$0xff]
    %v24 = vld [vmem:[%s1 + $0x8] sm:$0xff]
    %v25 = vld [vmem:[%s1 + $0x10] sm:$0xff]
    %v26 = vld [vmem:[%s1 + $0x18] sm:$0xff]
    %v27 = vld [vmem:[%s1 + $0x20] sm:$0xff]
    %v28 = vld [vmem:[%s1 + $0x28] sm:$0xff]
    %v29 = vld [vmem:[%s1 + $0x30] sm:$0xff]
    %v30 = vld [vmem:[%s1 + $0x38] sm:$0xff]
    %v31 = vld [vmem:[%s1 + $0x40] sm:$0xff]
    %v32 = vld [vmem:[%s1 + $0x48] sm:$0xff]
    %v33 = vld [vmem:[%s1 + $0x50] sm:$0xff]
    %v34 = vld [vmem:[%s1 + $0x58] sm:$0xff]
    %v35 = vld [vmem:[%s1 + $0x60] sm:$0xff]
    %v36 = vld [vmem:[%s1 + $0x68] sm:$0xff]
    %v37 = vld [vmem:[%s1 + $0x70] sm:$0xff]
    %v38 = vld [vmem:[%s1 + $0x78] sm:$0xff]
    %v39 = vld [vmem:[%s2] sm:$0x1]
    %v41 = vlaneseq
    %v42 = vshrl.u32 %v41, 7
    %v43 = vsub.s32 0, %v42
    %v44 = vrot.slane %v39, %v43
    %46 = vmatprep.subr.mxu0 0.0
    %47 = vmatpush1.msra.mxu0 %v38
    %48 = vmatprep.subr.mxu0 0.0
    %49 = vmatpush1.msra.mxu0 %v37
    %50 = vmatprep.subr.mxu0 0.0
    %51 = vmatpush1.msra.mxu0 %v36
    %52 = vmatprep.subr.mxu0 0.0
    %53 = vmatpush1.msra.mxu0 %v35
    %54 = vmatprep.subr.mxu0 0.0
    %55 = vmatpush1.msra.mxu0 %v34
    %56 = vmatprep.subr.mxu0 0.0
    %57 = vmatpush1.msra.mxu0 %v33
    %58 = vmatprep.subr.mxu0 0.0
    %59 = vmatpush1.msra.mxu0 %v32
    %60 = vmatprep.subr.mxu0 0.0
    %61 = vmatpush1.msra.mxu0 %v31
    %62 = vmatprep.subr.mxu0 0.0
    %63 = vmatpush1.msra.mxu0 %v30
    %64 = vmatprep.subr.mxu0 0.0
    %65 = vmatpush1.msra.mxu0 %v29
    %66 = vmatprep.subr.mxu0 0.0
    %67 = vmatpush1.msra.mxu0 %v28
    %68 = vmatprep.subr.mxu0 0.0
    %69 = vmatpush1.msra.mxu0 %v27
    %70 = vmatprep.subr.mxu0 0.0
    %71 = vmatpush1.msra.mxu0 %v26
    %72 = vmatprep.subr.mxu0 0.0
    %73 = vmatpush1.msra.mxu0 %v25
    %74 = vmatprep.subr.mxu0 0.0
    %75 = vmatpush1.msra.mxu0 %v24
    %76 = vmatprep.subr.mxu0 0.0
    %77 = vmatpush1.msra.mxu0 %v23
    %78 = vmatprep.subr.mxu0 0.0
    %79 = vmatpush2.msra.mxu0 0.0
    %80 = vmatprep.subr.mxu0 0.0
    %81 = vmatpush2.msra.mxu0 0.0
    %82 = vmatprep.subr.mxu0 0.0
    %83 = vmatpush2.msra.mxu0 0.0
    %84 = vmatprep.subr.mxu0 0.0
    %85 = vmatpush2.msra.mxu0 0.0
    %86 = vmatprep.subr.mxu0 0.0
    %87 = vmatpush2.msra.mxu0 0.0
    %88 = vmatprep.subr.mxu0 0.0
    %89 = vmatpush2.msra.mxu0 0.0
    %90 = vmatprep.subr.mxu0 0.0
    %91 = vmatpush2.msra.mxu0 0.0
    %92 = vmatprep.subr.mxu0 0.0
    %93 = vmatpush2.msra.mxu0 0.0
    %94 = vmatprep.subr.mxu0 0.0
    %95 = vmatpush2.msra.mxu0 0.0
    %96 = vmatprep.subr.mxu0 0.0
    %97 = vmatpush2.msra.mxu0 0.0
    %98 = vmatprep.subr.mxu0 0.0
    %99 = vmatpush2.msra.mxu0 0.0
    %100 = vmatprep.subr.mxu0 0.0
    %101 = vmatpush2.msra.mxu0 0.0
    %102 = vmatprep.subr.mxu0 0.0
    %103 = vmatpush2.msra.mxu0 0.0
    %104 = vmatprep.subr.mxu0 0.0
    %105 = vmatpush2.msra.mxu0 0.0
    %106 = vmatprep.subr.mxu0 0.0
    %107 = vmatpush2.msra.mxu0 0.0
    %108 = vmatprep.subr.mxu0 0.0
    %109 = vmatpush2.msra.mxu0 0.0
    %110 = vmatprep.mubr.f32.mxu0 0.0
    %111 = vmatmul.mubr.f32.gmra.mxu0 %v22
    %v112 = vpop.f32.mrf.mxu0
    %v113 = vadd.f32 %v44, %v112
    %v114 = vpop.f32.mrf.mxu0
    %115 = vdwg.mxu0
    %v116 = vmax.f32 %v113, 0.0
    %v117 = vld [vmem:[%s3] sm:$0x1]
    %s118 = sld [smem:[#allocation2]]
    %v119 = vstv %s118
    %vm120 = vcmask 523264
    %v122 = vsel %vm120, %v117, 0
    %v125 = vsel %vm120, %v116, 0
    %127 = vmatprep.subr.mxu0 0.0
    %128 = vmatpush1.xpose.msra.mxu0 0.0
    %129 = vmatprep.subr.mxu0 0.0
    %130 = vmatpush1.xpose.msra.mxu0 0.0
    %131 = vmatprep.subr.mxu0 0.0
    %132 = vmatpush1.xpose.msra.mxu0 0.0
    %133 = vmatprep.subr.mxu0 0.0
    %134 = vmatpush1.xpose.msra.mxu0 0.0
    %135 = vmatprep.subr.mxu0 0.0
    %136 = vmatpush1.xpose.msra.mxu0 0.0
    %137 = vmatprep.subr.mxu0 0.0
    %138 = vmatpush1.xpose.msra.mxu0 0.0
    %139 = vmatprep.subr.mxu0 0.0
    %140 = vmatpush1.xpose.msra.mxu0 0.0
    %141 = vmatprep.subr.mxu0 0.0
    %142 = vmatpush1.xpose.msra.mxu0 0.0
    %143 = vmatprep.subr.mxu0 0.0
    %144 = vmatpush1.xpose.msra.mxu0 0.0
    %145 = vmatprep.subr.mxu0 0.0
    %146 = vmatpush1.xpose.msra.mxu0 0.0
    %147 = vmatprep.subr.mxu0 0.0
    %148 = vmatpush1.xpose.msra.mxu0 0.0
    %149 = vmatprep.subr.mxu0 0.0
    %150 = vmatpush1.xpose.msra.mxu0 0.0
    %151 = vmatprep.subr.mxu0 0.0
    %152 = vmatpush1.xpose.msra.mxu0 0.0
    %153 = vmatprep.subr.mxu0 0.0
    %154 = vmatpush1.xpose.msra.mxu0 0.0
    %155 = vmatprep.subr.mxu0 0.0
    %156 = vmatpush1.xpose.msra.mxu0 0.0
    %157 = vmatprep.subr.mxu0 0.0
    %158 = vmatpush1.xpose.msra.mxu0 %v125
    %159 = vmatprep.subr.mxu0 0.0
    %160 = vmatpush2.xpose.msra.mxu0 0.0
    %161 = vmatprep.subr.mxu0 0.0
    %162 = vmatpush2.xpose.msra.mxu0 0.0
    %163 = vmatprep.subr.mxu0 0.0
    %164 = vmatpush2.xpose.msra.mxu0 0.0
    %165 = vmatprep.subr.mxu0 0.0
    %166 = vmatpush2.xpose.msra.mxu0 0.0
    %167 = vmatprep.subr.mxu0 0.0
    %168 = vmatpush2.xpose.msra.mxu0 0.0
    %169 = vmatprep.subr.mxu0 0.0
    %170 = vmatpush2.xpose.msra.mxu0 0.0
    %171 = vmatprep.subr.mxu0 0.0
    %172 = vmatpush2.xpose.msra.mxu0 0.0
    %173 = vmatprep.subr.mxu0 0.0
    %174 = vmatpush2.xpose.msra.mxu0 0.0
    %175 = vmatprep.subr.mxu0 0.0
    %176 = vmatpush2.xpose.msra.mxu0 0.0
    %177 = vmatprep.subr.mxu0 0.0
    %178 = vmatpush2.xpose.msra.mxu0 0.0
    %179 = vmatprep.subr.mxu0 0.0
    %180 = vmatpush2.xpose.msra.mxu0 0.0
    %181 = vmatprep.subr.mxu0 0.0
    %182 = vmatpush2.xpose.msra.mxu0 0.0
    %183 = vmatprep.subr.mxu0 0.0
    %184 = vmatpush2.xpose.msra.mxu0 0.0
    %185 = vmatprep.subr.mxu0 0.0
    %186 = vmatpush2.xpose.msra.mxu0 0.0
    %187 = vmatprep.subr.mxu0 0.0
    %188 = vmatpush2.xpose.msra.mxu0 0.0
    %189 = vmatprep.subr.mxu0 0.0
    %190 = vmatpush2.xpose.msra.mxu0 0.0
    %191 = vmatprep.mubr.f32.mxu0 0.0
    %192 = vmatmul.mubr.f32.gmra.mxu0 %v122
    %v193 = vpop.f32.mrf.mxu0
    %v194 = vadd.f32 %v119, %v193
    %v195 = vpop.f32.mrf.mxu0
    %196 = vdwg.mxu0
    %vm197 = vcmask 57344
    %198 = vst.msk [vmem:[#allocation3] sm:$0x1] %vm197, %v194
    // Predicated region
    $region22: #{tpu_custom_call.1} parent=1 // pred_check
      _
    $region23: #{tpu_custom_call.1} parent=1 // pred_check_branch
      %200 = sbr.rel (0) target = $region25
    $region24: #{tpu_custom_call.1} parent=1 // pred_region
      %s202 = ssub.s32 16, 16
      %203 = vsyncadd [#allocation4], %s202
      %s205 = sshll.u32 [#allocation3], 4
      %s206 = int_to_ptr.vmem [resolvable:$true] %s205
      %208 = dma.vmem_to_hbm [thread:$0]  %s206, 16, %s5, [#allocation4]
    $region25: #{tpu_custom_call.1} parent=1 // pred_fallthru
      _
    // Predicated region
    $region26: #{tpu_custom_call.1} parent=1 // pred_check
      _
    $region27: #{tpu_custom_call.1} parent=1 // pred_check_branch
      %210 = sbr.rel (0) target = $region29
    $region28: #{tpu_custom_call.1} parent=1 // pred_region
      %211 = dma.done [#allocation4], 16
    $region29: #{tpu_custom_call.1} parent=1 // pred_fallthru
      _
    %212 = vsyncpa [#allocation4], 1

</llo_original>
